<compile_context>
chip_gen: v6e
topology: v6e:2x2x1
jax: 0.10.0
libtpu: 0.0.40
codegen_flags: <defaults>
</compile_context>

<pallas_src>
import functools
import math

import jax
import jax.numpy as jnp
from jax.experimental import pallas as pl
from jax.experimental.pallas import tpu as pltpu


# --------------------------------------------------------------------------
# Kernel body: one (tm, D) row tile -> LayerNorm -> dense sublayer -> residual
# --------------------------------------------------------------------------
def _residual_conn_kernel(x_ref, w_ref, b_ref, o_ref, *, eps, d):
    """LayerNorm (affine already folded into W/b) -> MXU matmul -> residual add."""
    x = x_ref[...].astype(jnp.float32)

    # ---- LayerNorm statistics (unbiased std, ddof=1, eps added to std) ----
    mean = jnp.mean(x, axis=-1, keepdims=True)
    diff = x - mean
    var = jnp.sum(diff * diff, axis=-1, keepdims=True) * (1.0 / (d - 1))
    std = jnp.sqrt(var)
    # Reciprocal of the (tm, 1) column runs on the EUP (own bundle slot).
    inv = pl.reciprocal(std + eps, approx=True)
    normed = (diff * inv).astype(jnp.bfloat16)          # bf16 MXU operand

    # ---- sublayer: dense projection on the MXU (bf16 x bf16 -> f32 acc) ----
    y = jnp.dot(normed, w_ref[...], preferred_element_type=jnp.float32)
    y = y + b_ref[...]

    # ---- dropout (identity at inference) + residual add ----
    # TODO(synk): training-mode dropout (RNG mask) omitted; eval-mode identity.
    o_ref[...] = (x + y).astype(o_ref.dtype)


# --------------------------------------------------------------------------
# Host-side helpers
# --------------------------------------------------------------------------
def fold_sublayer_params(w, b, alpha, beta):
    """Fold the scalar LayerNorm affine into the sublayer weights, once:
       (alpha*n + beta) @ W + b == n @ (alpha*W) + (b + beta*W.sum(0))."""
    w_f32 = w.astype(jnp.float32)
    w_folded = jnp.asarray(alpha, jnp.float32) * w_f32
    b_folded = (b.astype(jnp.float32)
                + jnp.asarray(beta, jnp.float32) * jnp.sum(w_f32, axis=0))
    d = w.shape[-1]
    return w_folded.astype(jnp.bfloat16), b_folded.reshape(1, d).astype(jnp.float32)


def _vmem_budget_bytes():
    """~85% of this generation's VMEM capacity (v5e/v6e: 128 MiB, v7x: 64 MiB)."""
    try:
        cap = int(pltpu.get_tpu_info().vmem_capacity_bytes)
    except Exception:
        cap = 64 << 20            # conservative fallback valid on all generations
    return int(0.85 * cap)


def _pick_tile_rows(rows, d, x_bytes, out_bytes, resident_bytes, budget, tm_override):
    """Row-tile size: ~4 MiB f32-equivalent per x/out tile, fit inside VMEM budget."""
    if tm_override is not None:
        tm = int(tm_override)
    else:
        target_tile_bytes = 4 << 20                      # ~4 MiB per f32 tile
        tm = target_tile_bytes // (4 * d)
        tm = max(256, min(tm, 4096))
        # Per-row VMEM: double-buffered x + out tiles plus ~4 f32 temps of
        # in-kernel intermediates (x_f32 / diff / acc / normed).
        per_row = d * (2 * x_bytes + 2 * out_bytes + 16)
        tm_vmem = (budget - resident_bytes - 8 * d) // per_row
        tm = min(tm, max(int(tm_vmem), 8))
    rows8 = ((rows + 7) // 8) * 8
    tm = max(8, min(tm, rows8))
    return (tm // 8) * 8


def residual_conn_folded(x, w_bf16, b2, *, eps=1e-6, tm=None):
    """x: [..., D] (f32 or bf16); w_bf16: [D, D] folded weights; b2: [1, D] f32."""
    d = x.shape[-1]
    rows = math.prod(x.shape[:-1])
    out_dtype = x.dtype
    x2 = x.reshape(rows, d)

    budget = _vmem_budget_bytes()

    # Single-buffer the resident operands when the second W buffer would cost
    # real VMEM (constant index_map => it is never re-fetched anyway).
    w_bytes = d * d * 2
    single_buffer_resident = w_bytes >= (4 << 20)
    resident_bytes = w_bytes * (1 if single_buffer_resident else 2) + 2 * d * 4

    x_bytes = jnp.dtype(x.dtype).itemsize
    tm_eff = _pick_tile_rows(rows, d, x_bytes, x_bytes, resident_bytes, budget, tm)
    grid = (pl.cdiv(rows, tm_eff),)   # no padding; partial last block is masked

    def _resident_spec(shape):
        if single_buffer_resident:
            return pl.BlockSpec(shape, lambda i: (0, 0),
                                pipeline_mode=pl.Buffered(1))
        return pl.BlockSpec(shape, lambda i: (0, 0))

    # TODO(synk): for very large D (>= ~2048) on v7x, add an output-column grid
    # axis over W instead of only shrinking tm.

    kernel = functools.partial(_residual_conn_kernel, eps=float(eps), d=d)

    out = pl.pallas_call(
        kernel,
        out_shape=jax.ShapeDtypeStruct((rows, d), out_dtype),
        grid_spec=pltpu.PrefetchScalarGridSpec(
            num_scalar_prefetch=0,
            grid=grid,
            in_specs=[
                pl.BlockSpec((tm_eff, d), lambda i: (i, 0)),   # x row tile
                _resident_spec((d, d)),                        # W (resident, bf16)
                _resident_spec((1, d)),                        # bias (resident)
            ],
            out_specs=pl.BlockSpec((tm_eff, d), lambda i: (i, 0)),
        ),
        compiler_params=pltpu.CompilerParams(
            dimension_semantics=("parallel",),   # row grid shards across v7x's 2 TCs
            vmem_limit_bytes=budget,
        ),
    )(x2, w_bf16, b2)

    return out.reshape(x.shape)


def make_residual_conn(w, b, alpha, beta, *, eps=1e-6, tm=None):
    """One-time parameter folding; returns a jitted forward fn x -> out."""
    w_bf16, b2 = fold_sublayer_params(w, b, alpha, beta)

    @jax.jit
    def fwd(x):
        return residual_conn_folded(x, w_bf16, b2, eps=eps, tm=tm)

    return fwd


def residual_conn(x, w, b, alpha, beta, *, eps=1e-6, tm=None):
    """Convenience one-shot entry point (folds parameters per call)."""
    w_bf16, b2 = fold_sublayer_params(w, b, alpha, beta)
    return residual_conn_folded(x, w_bf16, b2, eps=eps, tm=tm)


# --------------------------------------------------------------------------
# Pure-JAX reference (matches the PyTorch module semantics)
# --------------------------------------------------------------------------
def reference(x, w, b, alpha, beta, eps=1e-6):
    mean = jnp.mean(x, axis=-1, keepdims=True)
    std = jnp.sqrt(jnp.sum((x - mean) ** 2, axis=-1, keepdims=True) / (x.shape[-1] - 1))
    ln = alpha * ((x - mean) / (std + eps)) + beta
    sub = jnp.einsum("...sd,de->...se", ln, w) + b
    return x + sub


if __name__ == "__main__":
    # ---- Case 1: module-scale shapes (batch=2, seq=8, d_model=128), f32 ----
    B, S, D = 2, 8, 128
    kx, kw, kb = jax.random.split(jax.random.PRNGKey(0), 3)
    x = jax.random.normal(kx, (B, S, D), dtype=jnp.float32)
    w = jax.random.normal(kw, (D, D), dtype=jnp.float32) * (1.0 / jnp.sqrt(D))
    b = jax.random.normal(kb, (D,), dtype=jnp.float32) * 0.02
    alpha = jnp.float32(1.25)
    beta = jnp.float32(-0.5)

    fwd = make_residual_conn(w, b, alpha, beta)
    out = jax.block_until_ready(fwd(x))
    ref = reference(x, w, b, alpha, beta)
    assert out.shape == (B, S, D)
    # bf16 MXU operands + approximate reciprocal -> loosened tolerance vs f32 ref.
    assert jnp.allclose(out, ref, atol=5e-2, rtol=5e-2), \
        f"case1 max abs err {jnp.max(jnp.abs(out - ref))}"

    # ---- Case 2: ragged rows (rows % tm != 0) + bf16 activations end-to-end ----
    # Exercises the no-pad cdiv grid with a masked partial last block.
    B2, S2, D2 = 2, 13, 256
    kx2, kw2, kb2 = jax.random.split(jax.random.PRNGKey(1), 3)
    x_bf = jax.random.normal(kx2, (B2, S2, D2), dtype=jnp.float32).astype(jnp.bfloat16)
    w2 = jax.random.normal(kw2, (D2, D2), dtype=jnp.float32) * (1.0 / jnp.sqrt(D2))
    b2v = jax.random.normal(kb2, (D2,), dtype=jnp.float32) * 0.02

    out2 = residual_conn(x_bf, w2, b2v, jnp.float32(0.8), jnp.float32(0.1), tm=8)
    out2 = jax.block_until_ready(out2)
    ref2 = reference(x_bf.astype(jnp.float32), w2, b2v, 0.8, 0.1)
    assert out2.shape == (B2, S2, D2)
    assert out2.dtype == jnp.bfloat16
    assert jnp.allclose(out2.astype(jnp.float32), ref2, atol=1e-1, rtol=1e-1), \
        f"case2 max abs err {jnp.max(jnp.abs(out2.astype(jnp.float32) - ref2))}"

    print("KERNEL_OK")
</pallas_src>

<mosaic_0001>
module attributes {stable_mosaic.version = 11 : i64} {
  func.func @_residual_conn_kernel(%arg0: i32, %arg1: memref<16x128xf32, #tpu.memory_space<vmem>>, %arg2: memref<128x128xbf16, #tpu.memory_space<vmem>>, %arg3: memref<1x128xf32, #tpu.memory_space<vmem>>, %arg4: memref<16x128xf32, #tpu.memory_space<vmem>>) attributes {dimension_semantics = [#tpu.dimension_semantics<parallel>], iteration_bounds = array<i64: 1>, scalar_prefetch = 0 : i64, scratch_operands = 0 : i64, tpu.core_type = #tpu.core_type<tc>, window_params = [{transform_indices = @transform_0, window_bounds = array<i64: 16, 128>}, {pipeline_mode = #tpu.pipeline_mode<synchronous>, transform_indices = @transform_1, window_bounds = array<i64: 128, 128>}, {pipeline_mode = #tpu.pipeline_mode<synchronous>, transform_indices = @transform_2, window_bounds = array<i64: 1, 128>}, {transform_indices = @transform_3, window_bounds = array<i64: 16, 128>}]} {
    %c0 = arith.constant 0 : index
    %c0_0 = arith.constant 0 : index
    %0 = vector.load %arg1[%c0, %c0_0] : memref<16x128xf32, #tpu.memory_space<vmem>>, vector<16x128xf32>
    %cst = arith.constant dense<0.000000e+00> : vector<16xf32>
    %1 = vector.multi_reduction <add>, %0, %cst [1] : vector<16x128xf32> to vector<16xf32>
    %2 = vector.shape_cast %1 : vector<16xf32> to vector<16x1xf32>
    %cst_1 = arith.constant 1.280000e+02 : f32
    %3 = vector.broadcast %cst_1 : f32 to vector<16x1xf32>
    %4 = arith.divf %2, %3 : vector<16x1xf32>
    %5 = vector.broadcast %4 : vector<16x1xf32> to vector<16x128xf32>
    %6 = arith.subf %0, %5 : vector<16x128xf32>
    %7 = arith.mulf %6, %6 : vector<16x128xf32>
    %cst_2 = arith.constant dense<0.000000e+00> : vector<16xf32>
    %8 = vector.multi_reduction <add>, %7, %cst_2 [1] : vector<16x128xf32> to vector<16xf32>
    %9 = vector.shape_cast %8 : vector<16xf32> to vector<16x1xf32>
    %cst_3 = arith.constant 0.00787401571 : f32
    %10 = vector.broadcast %cst_3 : f32 to vector<16x1xf32>
    %11 = arith.mulf %9, %10 : vector<16x1xf32>
    %12 = math.sqrt %11 : vector<16x1xf32>
    %cst_4 = arith.constant 9.99999997E-7 : f32
    %13 = vector.broadcast %cst_4 : f32 to vector<16x1xf32>
    %14 = arith.addf %12, %13 : vector<16x1xf32>
    %15 = tpu.reciprocal %14 {approx = true} : vector<16x1xf32> -> vector<16x1xf32>
    %16 = vector.broadcast %15 : vector<16x1xf32> to vector<16x128xf32>
    %17 = arith.mulf %6, %16 : vector<16x128xf32>
    %18 = arith.truncf %17 : vector<16x128xf32> to vector<16x128xbf16>
    %c0_5 = arith.constant 0 : index
    %c0_6 = arith.constant 0 : index
    %19 = vector.load %arg2[%c0_5, %c0_6] : memref<128x128xbf16, #tpu.memory_space<vmem>>, vector<128x128xbf16>
    %cst_7 = arith.constant dense<0.000000e+00> : vector<16x128xf32>
    %20 = tpu.matmul %18, %19, %cst_7 {dimension_numbers = #tpu.dot_dimension_numbers<[1], [0], [0], [1], [0, 0, 1, 1], [], []>} : vector<16x128xbf16>, vector<128x128xbf16>, vector<16x128xf32> -> vector<16x128xf32>
    %c0_8 = arith.constant 0 : index
    %c0_9 = arith.constant 0 : index
    %21 = vector.load %arg3[%c0_8, %c0_9] : memref<1x128xf32, #tpu.memory_space<vmem>>, vector<1x128xf32>
    %22 = vector.broadcast %21 : vector<1x128xf32> to vector<16x128xf32>
    %23 = arith.addf %20, %22 : vector<16x128xf32>
    %24 = arith.addf %0, %23 : vector<16x128xf32>
    %c0_10 = arith.constant 0 : index
    %c0_11 = arith.constant 0 : index
    %25 = vector.load %arg4[%c0_10, %c0_11] : memref<16x128xf32, #tpu.memory_space<vmem>>, vector<16x128xf32>
    tpu.vector_store %arg4[%c0_10, %c0_11], %24 {strides = array<i32>} : memref<16x128xf32, #tpu.memory_space<vmem>>, vector<16x128xf32>,
    return
  }
  func.func @transform_0(%arg0: i32) -> (i32, i32) {
    %c0_i32 = arith.constant 0 : i32
    %c0_i32_0 = arith.constant 0 : i32
    return %arg0, %c0_i32 : i32, i32
  }
  func.func @transform_1(%arg0: i32) -> (i32, i32) {
    %c0_i32 = arith.constant 0 : i32
    %c0_i32_0 = arith.constant 0 : i32
    %c0_i32_1 = arith.constant 0 : i32
    return %c0_i32, %c0_i32_0 : i32, i32
  }
  func.func @transform_2(%arg0: i32) -> (i32, i32) {
    %c0_i32 = arith.constant 0 : i32
    %c0_i32_0 = arith.constant 0 : i32
    %c0_i32_1 = arith.constant 0 : i32
    return %c0_i32, %c0_i32_0 : i32, i32
  }
  func.func @transform_3(%arg0: i32) -> (i32, i32) {
    %c0_i32 = arith.constant 0 : i32
    %c0_i32_0 = arith.constant 0 : i32
    return %arg0, %c0_i32 : i32, i32
  }
}

</mosaic_0001>

<llo_original>
// kernel: fwd.1
$region0: #{fwd.1}
  #allocation0 [shape = 'u32[]', space=smem, size = 0x4, offset = 0x4, fixed_abs, tag = 'smem constant byte address 0x4 - core index']
  #allocation1 [shape = 'u32[144,128]{1,0:T(1,128)}', space=vmem, size = 0x12000, scoped, tag = 'internal scratch']
  %s0 = inlined_call_operand.hbm [shape: f32[16,128], index: 0, kind: input, shape index: {}]
  %s1 = inlined_call_operand.hbm [shape: bf16[128,128], index: 1, kind: input, shape index: {}]
  %s2 = inlined_call_operand.vmem [shape: f32[1,128], index: 2, kind: input, shape index: {}]
  %s3 = inlined_call_operand.hbm [shape: f32[16,128], index: 3, kind: output, shape index: {}]
  %s4 = sld [smem:[#allocation0]]
  $region30: #{fwd.1} parent=0
    _
  %s6 = ssub.s32 1, %s4
  %s7 = scalar_select 0, %s6, %s4
  $region1: #{fwd.1} parent=0
    #allocation2 [shape = 'u8[8192]{0}', space=vmem, size = 0x2000, scoped, tag = 'input window, operand 0, single buffered']
    #allocation3 [shape = 's32[1]{0}', space=sflag, size = 0x4, scoped, tag = 'scoped memory for fwd.1']
    #allocation4 [shape = 's32[1]{0}', space=sflag, size = 0x4, scoped, tag = 'scoped memory for fwd.1']
    #allocation5 [shape = 'u8[32768]{0}', space=vmem, size = 0x8000, scoped, tag = 'input window, operand 1, single buffered']
    #allocation6 [shape = 's32[1]{0}', space=sflag, size = 0x4, scoped, tag = 'scoped memory for fwd.1']
    #allocation7 [shape = 'u8[8192]{0}', space=vmem, size = 0x2000, scoped, tag = 'output window, operand 0, single buffered']
    %8 = vsyncpa [#allocation3], 0
    %9 = vsyncpa [#allocation6], 0
    %10 = vsyncpa [#allocation4], 0
    // Predicated region
    $region2: #{fwd.1} parent=1 // pred_check
      _
    $region3: #{fwd.1} parent=1 // pred_check_branch
      %12 = sbr.rel (0) target = $region5
    $region4: #{fwd.1} parent=1 // pred_region
      %s14 = ssub.s32 256, 256
      %15 = vsyncadd [#allocation3], %s14
      %s16 = sshll.u32 [#allocation2], 4
      %s17 = int_to_ptr.vmem [resolvable:$true] %s16
      %22 = dma.hbm_to_vmem [thread:$0]  %s0, 256, %s17, [#allocation3], 128, 128, 8
    $region5: #{fwd.1} parent=1 // pred_fallthru
      _
    // Predicated region
    $region6: #{fwd.1} parent=1 // pred_check
      _
    $region7: #{fwd.1} parent=1 // pred_check_branch
      %24 = sbr.rel (0) target = $region9
    $region8: #{fwd.1} parent=1 // pred_region
      %s26 = ssub.s32 1024, 1024
      %27 = vsyncadd [#allocation6], %s26
      %s28 = sshll.u32 [#allocation5], 4
      %s29 = int_to_ptr.vmem [resolvable:$true] %s28
      %34 = dma.hbm_to_vmem [thread:$0]  %s1, 1024, %s29, [#allocation6], 64, 64, 4
    $region9: #{fwd.1} parent=1 // pred_fallthru
      _
    // Predicated region
    $region10: #{fwd.1} parent=1 // pred_check
      _
    $region11: #{fwd.1} parent=1 // pred_check_branch
      %36 = sbr.rel (0) target = $region13
    $region12: #{fwd.1} parent=1 // pred_region
      _
    $region13: #{fwd.1} parent=1 // pred_fallthru
      _
    // Predicated region
    $region14: #{fwd.1} parent=1 // pred_check
      _
    $region15: #{fwd.1} parent=1 // pred_check_branch
      %38 = sbr.rel (0) target = $region17
    $region16: #{fwd.1} parent=1 // pred_region
      %39 = dma.done [#allocation3], 256
    $region17: #{fwd.1} parent=1 // pred_fallthru
      _
    // Predicated region
    $region18: #{fwd.1} parent=1 // pred_check
      _
    $region19: #{fwd.1} parent=1 // pred_check_branch
      %41 = sbr.rel (0) target = $region21
    $region20: #{fwd.1} parent=1 // pred_region
      %42 = dma.done [#allocation6], 1024
    $region21: #{fwd.1} parent=1 // pred_fallthru
      _
    %v44 = vld [vmem:[#allocation2] sm:$0xff]
    %v45 = vld [vmem:[#allocation2 + $0x8] sm:$0xff]
    %46 = vadd.xlane.f32.xlu0 %v44
    %v47 = vpop.xlane.xlu0 %46
    %48 = vadd.xlane.f32.xlu0 %v45
    %v49 = vpop.xlane.xlu0 %48
    %v50 = vrcp.pop 128.0
    %v51 = vmul.f32 %v47, %v50
    %v52 = vmul.f32 %v49, %v50
    %v53 = vsub.f32 %v44, %v51
    %v54 = vsub.f32 %v45, %v52
    %v55 = vmul.f32 %v53, %v53
    %v56 = vmul.f32 %v54, %v54
    %57 = vadd.xlane.f32.xlu0 %v55
    %v58 = vpop.xlane.xlu0 %57
    %59 = vadd.xlane.f32.xlu0 %v56
    %v60 = vpop.xlane.xlu0 %59
    %v61 = vmul.f32 %v58, 0.007874016
    %v62 = vmul.f32 %v60, 0.007874016
    %v63 = vrsqrt.pop %v61
    %v64 = vmul.f32 %v61, %v63
    %vm65 = vcmp.eq.f32.partialorder %v61, inf
    %v66 = vsel %vm65, %v61, %v64
    %vm67 = vcmp.eq.f32.partialorder %v61, 0.0
    %v68 = vand.u32 %v61, 2147483648
    %v69 = vsel %vm67, %v68, %v66
    %v70 = vrsqrt.pop %v62
    %v71 = vmul.f32 %v62, %v70
    %vm72 = vcmp.eq.f32.partialorder %v62, inf
    %v73 = vsel %vm72, %v62, %v71
    %vm74 = vcmp.eq.f32.partialorder %v62, 0.0
    %v75 = vand.u32 %v62, 2147483648
    %v76 = vsel %vm74, %v75, %v73
    %v77 = vadd.f32 %v69, 1e-06
    %v78 = vadd.f32 %v76, 1e-06
    %v79 = vrcp.pop %v77
    %v80 = vrcp.pop %v78
    %v81 = vmul.f32 %v53, %v79
    %v82 = vmul.f32 %v54, %v80
    %v83 = vpack.c.bf16 %v82, %v81
    %v84 = vld [vmem:[#allocation5] sm:$0xf]
    %v85 = vld [vmem:[#allocation5 + $0x4] sm:$0xf]
    %v86 = vld [vmem:[#allocation5 + $0x8] sm:$0xf]
    %v87 = vld [vmem:[#allocation5 + $0xc] sm:$0xf]
    %v88 = vld [vmem:[#allocation5 + $0x10] sm:$0xf]
    %v89 = vld [vmem:[#allocation5 + $0x14] sm:$0xf]
    %v90 = vld [vmem:[#allocation5 + $0x18] sm:$0xf]
    %v91 = vld [vmem:[#allocation5 + $0x1c] sm:$0xf]
    %v92 = vld [vmem:[#allocation5 + $0x20] sm:$0xf]
    %v93 = vld [vmem:[#allocation5 + $0x24] sm:$0xf]
    %v94 = vld [vmem:[#allocation5 + $0x28] sm:$0xf]
    %v95 = vld [vmem:[#allocation5 + $0x2c] sm:$0xf]
    %v96 = vld [vmem:[#allocation5 + $0x30] sm:$0xf]
    %v97 = vld [vmem:[#allocation5 + $0x34] sm:$0xf]
    %v98 = vld [vmem:[#allocation5 + $0x38] sm:$0xf]
    %v99 = vld [vmem:[#allocation5 + $0x3c] sm:$0xf]
    %v100 = vld [vmem:[%s2] sm:$0x1]
    %v102 = vlaneseq
    %v103 = vshrl.u32 %v102, 7
    %v104 = vsub.s32 0, %v103
    %v105 = vrot.slane %v100, %v104
    %v123 = vunpack.c.l.b16 %v84
    %v124 = vunpack.c.l.b16 %v85
    %v125 = vunpack.c.l.b16 %v86
    %v126 = vunpack.c.l.b16 %v87
    %v127 = vunpack.c.l.b16 %v88
    %v128 = vunpack.c.l.b16 %v89
    %v129 = vunpack.c.l.b16 %v90
    %v130 = vunpack.c.l.b16 %v91
    %v131 = vunpack.c.l.b16 %v92
    %v132 = vunpack.c.l.b16 %v93
    %v133 = vunpack.c.l.b16 %v94
    %v134 = vunpack.c.l.b16 %v95
    %v135 = vunpack.c.l.b16 %v96
    %v136 = vunpack.c.l.b16 %v97
    %v137 = vunpack.c.l.b16 %v98
    %v138 = vunpack.c.l.b16 %v99
    %v139 = vpack.c.b16 %v124, %v123
    %v140 = vpack.c.b16 %v126, %v125
    %v141 = vpack.c.b16 %v128, %v127
    %v142 = vpack.c.b16 %v130, %v129
    %v143 = vpack.c.b16 %v132, %v131
    %v144 = vpack.c.b16 %v134, %v133
    %v145 = vpack.c.b16 %v136, %v135
    %v146 = vpack.c.b16 %v138, %v137
    %155 = vmatprep.subr.bf16.mxu0 0
    %156 = vmatpush1.bf16.msra.mxu0 %v146
    %157 = vmatprep.subr.bf16.mxu0 0
    %158 = vmatpush1.bf16.msra.mxu0 %v145
    %159 = vmatprep.subr.bf16.mxu0 0
    %160 = vmatpush1.bf16.msra.mxu0 %v144
    %161 = vmatprep.subr.bf16.mxu0 0
    %162 = vmatpush1.bf16.msra.mxu0 %v143
    %163 = vmatprep.subr.bf16.mxu0 0
    %164 = vmatpush1.bf16.msra.mxu0 %v142
    %165 = vmatprep.subr.bf16.mxu0 0
    %166 = vmatpush1.bf16.msra.mxu0 %v141
    %167 = vmatprep.subr.bf16.mxu0 0
    %168 = vmatpush1.bf16.msra.mxu0 %v140
    %169 = vmatprep.subr.bf16.mxu0 0
    %170 = vmatpush1.bf16.msra.mxu0 %v139
    %171 = vmatprep.subr.bf16.mxu0 0
    %172 = vmatpush2.bf16.msra.mxu0 0
    %173 = vmatprep.subr.bf16.mxu0 0
    %174 = vmatpush2.bf16.msra.mxu0 0
    %175 = vmatprep.subr.bf16.mxu0 0
    %176 = vmatpush2.bf16.msra.mxu0 0
    %177 = vmatprep.subr.bf16.mxu0 0
    %178 = vmatpush2.bf16.msra.mxu0 0
    %179 = vmatprep.subr.bf16.mxu0 0
    %180 = vmatpush2.bf16.msra.mxu0 0
    %181 = vmatprep.subr.bf16.mxu0 0
    %182 = vmatpush2.bf16.msra.mxu0 0
    %183 = vmatprep.subr.bf16.mxu0 0
    %184 = vmatpush2.bf16.msra.mxu0 0
    %185 = vmatprep.subr.bf16.mxu0 0
    %186 = vmatpush2.bf16.msra.mxu0 0
    %187 = vmatprep.mubr.bf16.mxu0 0
    %188 = vmatmul.mubr.bf16.gmra.mxu0 %v83
    %v189 = vpop.f32.mrf.mxu0
    %v190 = vadd.f32 %v105, %v189
    %v191 = vpop.f32.mrf.mxu0
    %v192 = vpop.f32.mrf.mxu0
    %v193 = vadd.f32 %v105, %v192
    %v194 = vpop.f32.mrf.mxu0
    %195 = vdwg.mxu0
    %v196 = vadd.f32 %v44, %v190
    %v197 = vadd.f32 %v45, %v193
    %198 = vst [vmem:[#allocation7] sm:$0xff] %v196
    %199 = vst [vmem:[#allocation7 + $0x8] sm:$0xff] %v197
    // Predicated region
    $region22: #{fwd.1} parent=1 // pred_check
      _
    $region23: #{fwd.1} parent=1 // pred_check_branch
      %201 = sbr.rel (0) target = $region25
    $region24: #{fwd.1} parent=1 // pred_region
      %s203 = ssub.s32 256, 256
      %204 = vsyncadd [#allocation4], %s203
      %s205 = sshll.u32 [#allocation7], 4
      %s206 = int_to_ptr.vmem [resolvable:$true] %s205
      %211 = dma.vmem_to_hbm [thread:$0]  %s206, 256, %s3, [#allocation4], 128, 128, 8
    $region25: #{fwd.1} parent=1 // pred_fallthru
      _
    // Predicated region
    $region26: #{fwd.1} parent=1 // pred_check
      _
    $region27: #{fwd.1} parent=1 // pred_check_branch
      %213 = sbr.rel (0) target = $region29
    $region28: #{fwd.1} parent=1 // pred_region
      %214 = dma.done [#allocation4], 256
    $region29: #{fwd.1} parent=1 // pred_fallthru
      _
    %215 = vsyncpa [#allocation3], 1
    %216 = vsyncpa [#allocation6], 1
    %217 = vsyncpa [#allocation4], 1

</llo_original>
